<compile_context>
chip_gen: v7x
topology: tpu7x:2x2x1
jax: 0.10.0
libtpu: 0.0.40
codegen_flags: <defaults>
</compile_context>

<pallas_src>
import functools

import jax
import jax.numpy as jnp
from jax.experimental import pallas as pl
from jax.experimental.pallas import tpu as pltpu


def _round_up(x, m):
    return ((x + m - 1) // m) * m


def _pick_block_n(N, M, F, vmem_budget_bytes):
    """Choose block_n (rows per grid step) from a per-row VMEM estimate."""
    lane = 128
    mf = M * F                       # entity tile is lane-dense (full trailing dim)
    fp = _round_up(F, lane)          # item / out / (TN,F) temps are lane-padded
    mp = _round_up(M, lane)          # adj tile is lane-padded
    per_row = 4 * (
        2 * mf                       # entity, double-buffered
        + 2 * fp + 2 * mp + 2 * fp   # item, adj, out (double-buffered)
        + mf                         # prod = entity * Wa2 temporary
        + (M + 4) * lane             # per-neighbour (TN,1) logit columns + softmax scalars
        + 2 * fp                     # weighted accumulator + misc
    )
    bn = vmem_budget_bytes // max(per_row, 1)
    bn = max(8, min(1024, (bn // 8) * 8))
    # Keep at least 2 grid steps when possible (v7x has 2 TensorCores per chip).
    bn = min(bn, max(8, _round_up(pl.cdiv(N, 2), 8)))
    return int(bn)


def _gat_kernel(item_ref, entity_ref, adj_ref, wa1_ref, wa2_ref, out_ref, *, alpha, M, F):
    # item_ref   : (TN, F)     f32
    # entity_ref : (TN, M*F)   f32, lane-dense (entity[n, m*F + f] == entity_embs[n, m, f])
    # adj_ref    : (TN, M)     f32
    # wa1_ref    : (1, F)      = W @ a[:H]
    # wa2_ref    : (1, M*F)    = W @ a[H:], tiled M times to align with the flattened entity
    item = item_ref[...]
    ent = entity_ref[...]
    adj = adj_ref[...]
    wa1 = wa1_ref[...]
    wa2t = wa2_ref[...]

    # Attention logits with the a-vector folded into W:
    #   s1[n]   = <item[n],       W @ a[:H]>
    #   s2[n,m] = <entity[n,m],   W @ a[H:]>
    s1 = jnp.sum(item * wa1, axis=1, keepdims=True)          # (TN, 1)
    prod = ent * wa2t                                          # (TN, M*F), full-lane VPU mul

    neg_big = jnp.float32(-9.0e15)
    logits = []
    for m in range(M):                                         # M is small; unrolled
        s2_m = jnp.sum(prod[:, m * F:(m + 1) * F], axis=1, keepdims=True)   # (TN, 1)
        e_m = s1 + s2_m
        e_m = jnp.where(e_m > 0, e_m, alpha * e_m)             # LeakyReLU(alpha)
        e_m = jnp.where(adj[:, m:m + 1] > 0, e_m, neg_big)     # adjacency mask
        logits.append(e_m)

    # Numerically stable masked softmax over the M neighbours (running max, VPU only).
    m_max = logits[0]
    for m in range(1, M):
        m_max = jnp.maximum(m_max, logits[m])

    # exp + unrolled accumulation of the attention-weighted entity sum.
    # Peak live data stays at (TN, F); no (TN, M, F) broadcast temporary.
    denom = jnp.zeros_like(s1)
    weighted = jnp.zeros_like(item)
    for m in range(M):
        p_m = jnp.exp(logits[m] - m_max)                       # (TN, 1), EUP
        denom = denom + p_m
        weighted = weighted + p_m * ent[:, m * F:(m + 1) * F]

    # Softmax normalisation: EUP approximate reciprocal + 2 Newton steps (f32-accurate,
    # keeps the divide off the VPU critical path).
    inv = pl.reciprocal(denom, approx=True)
    inv = inv * (2.0 - denom * inv)
    inv = inv * (2.0 - denom * inv)

    # F.dropout(attention) and the trailing dropout are identity in eval mode.
    # concat=False -> no ELU.
    # Note: output stays (TN, F); F < 128 means a masked store, but the output stream is
    # 1/M of the entity stream so it is not the bottleneck here.
    out_ref[...] = (weighted * inv + item).astype(out_ref.dtype)


def gat_forward(item_embs, entity_embs, adj, W, a, *, alpha=0.2, block_n=None,
                vmem_budget_bytes=12 * 1024 * 1024):
    N, F = item_embs.shape
    _, M, _ = entity_embs.shape
    H = W.shape[1]
    f32 = jnp.float32

    # --- Wa fold (exact f32, elementwise; no matmul-precision surprises) ---
    Wf = W.astype(f32)
    a1 = a[:H, 0].astype(f32)
    a2 = a[H:, 0].astype(f32)
    wa1 = jnp.sum(Wf * a1[None, :], axis=1)                    # (F,)  = W @ a[:H]
    wa2 = jnp.sum(Wf * a2[None, :], axis=1)                    # (F,)  = W @ a[H:]
    wa1_row = wa1[None, :]                                     # (1, F)
    wa2_tiled = jnp.tile(wa2, (M,))[None, :]                   # (1, M*F)

    # --- Lane-dense entity stream: (N, M, F) -> (N, M*F) (free reshape in HBM) ---
    entity_flat = entity_embs.reshape(N, M * F).astype(f32)
    item_f = item_embs.astype(f32)
    adj_f = adj.astype(f32)

    if block_n is None:
        block_n = _pick_block_n(N, M, F, vmem_budget_bytes)
    n_pad = _round_up(N, block_n)
    if n_pad != N:
        # Padded rows have adj == 0 -> uniform attention over zero entities -> output 0;
        # they are sliced off below.
        item_f = jnp.pad(item_f, ((0, n_pad - N), (0, 0)))
        entity_flat = jnp.pad(entity_flat, ((0, n_pad - N), (0, 0)))
        adj_f = jnp.pad(adj_f, ((0, n_pad - N), (0, 0)))

    grid = (n_pad // block_n,)
    kernel = functools.partial(_gat_kernel, alpha=float(alpha), M=M, F=F)

    out = pl.pallas_call(
        kernel,
        out_shape=jax.ShapeDtypeStruct((n_pad, F), item_embs.dtype),
        grid_spec=pltpu.PrefetchScalarGridSpec(
            num_scalar_prefetch=0,
            grid=grid,
            in_specs=[
                pl.BlockSpec((block_n, F), lambda i: (i, 0)),        # item block
                pl.BlockSpec((block_n, M * F), lambda i: (i, 0)),    # entity block (lane-dense)
                pl.BlockSpec((block_n, M), lambda i: (i, 0)),        # adj block
                pl.BlockSpec((1, F), lambda i: (0, 0)),              # Wa1 (constant block)
                pl.BlockSpec((1, M * F), lambda i: (0, 0)),          # Wa2 tiled (constant block)
            ],
            out_specs=pl.BlockSpec((block_n, F), lambda i: (i, 0)),
        ),
        compiler_params=pltpu.CompilerParams(
            dimension_semantics=("parallel",),
            vmem_limit_bytes=32 * 1024 * 1024,
        ),
    )(item_f, entity_flat, adj_f, wa1_row, wa2_tiled)

    return out[:N]


def _xavier_uniform(key, shape, gain):
    # torch.nn.init.xavier_uniform_ for 2D: fan_out = shape[0], fan_in = shape[1]
    fan_out, fan_in = shape[0], shape[1]
    bound = gain * (6.0 / (fan_in + fan_out)) ** 0.5
    return jax.random.uniform(key, shape, jnp.float32, -bound, bound)


def _reference(item_embs, entity_embs, adj, W, a, alpha):
    # Plain-JAX reference mirroring GraphAttentionLayer.forward (eval mode, concat=False).
    # HIGHEST precision so the reference matmuls are true f32 (no bf16 demotion).
    hp = jax.lax.Precision.HIGHEST
    Wh = jnp.matmul(item_embs, W, precision=hp)
    We = jnp.einsum("nmf,fh->nmh", entity_embs, W, precision=hp)
    a_in = jnp.concatenate([jnp.broadcast_to(Wh[:, None, :], We.shape), We], axis=-1)
    e = jnp.squeeze(jnp.matmul(a_in, a, precision=hp), -1)
    e = jnp.where(e > 0, e, alpha * e)
    att = jnp.where(adj > 0, e, jnp.full_like(e, -9.0e15))
    att = jax.nn.softmax(att, axis=1)
    weighted = jnp.einsum("nm,nmf->nf", att, entity_embs, precision=hp)
    return weighted + item_embs


if __name__ == "__main__":
    # Small shapes consistent with the module's forward.
    N, M = 16, 8          # N items, M entities per item
    nfeat, nhid = 32, 16  # in_features, out_features
    alpha = 0.2

    key = jax.random.PRNGKey(0)
    k_item, k_ent, k_adj, k_w, k_a = jax.random.split(key, 5)

    item_embs = jax.random.normal(k_item, (N, nfeat), jnp.float32)
    entity_embs = jax.random.normal(k_ent, (N, M, nfeat), jnp.float32)
    adj = (jax.random.uniform(k_adj, (N, M)) > 0.3).astype(jnp.float32)

    # Deterministic parameter init matching the module's __init__ shapes.
    W = _xavier_uniform(k_w, (nfeat, nhid), gain=1.414)      # self.W : (in, out)
    a = _xavier_uniform(k_a, (2 * nhid, 1), gain=1.414)      # self.a : (2*out, 1)

    out = gat_forward(item_embs, entity_embs, adj, W, a, alpha=alpha)
    out = jax.block_until_ready(out)

    ref = _reference(item_embs, entity_embs, adj, W, a, alpha)
    assert out.shape == (N, nfeat)
    assert jnp.allclose(out, ref, atol=1e-4, rtol=1e-4), "mismatch vs reference"

    print("KERNEL_OK")
</pallas_src>

<mosaic_0001>
module attributes {stable_mosaic.version = 11 : i64} {
  func.func @_gat_kernel(%arg0: i32, %arg1: memref<8x32xf32, #tpu.memory_space<vmem>>, %arg2: memref<8x256xf32, #tpu.memory_space<vmem>>, %arg3: memref<8x8xf32, #tpu.memory_space<vmem>>, %arg4: memref<1x32xf32, #tpu.memory_space<vmem>>, %arg5: memref<1x256xf32, #tpu.memory_space<vmem>>, %arg6: memref<8x32xf32, #tpu.memory_space<vmem>>) attributes {dimension_semantics = [#tpu.dimension_semantics<parallel>], iteration_bounds = array<i64: 2>, scalar_prefetch = 0 : i64, scratch_operands = 0 : i64, tpu.core_type = #tpu.core_type<tc>, window_params = [{transform_indices = @transform_0, window_bounds = array<i64: 8, 32>}, {transform_indices = @transform_1, window_bounds = array<i64: 8, 256>}, {transform_indices = @transform_2, window_bounds = array<i64: 8, 8>}, {pipeline_mode = #tpu.pipeline_mode<synchronous>, transform_indices = @transform_3, window_bounds = array<i64: 1, 32>}, {pipeline_mode = #tpu.pipeline_mode<synchronous>, transform_indices = @transform_4, window_bounds = array<i64: 1, 256>}, {transform_indices = @transform_5, window_bounds = array<i64: 8, 32>}]} {
    %c0 = arith.constant 0 : index
    %c0_0 = arith.constant 0 : index
    %0 = vector.load %arg1[%c0, %c0_0] : memref<8x32xf32, #tpu.memory_space<vmem>>, vector<8x32xf32>
    %c0_1 = arith.constant 0 : index
    %c0_2 = arith.constant 0 : index
    %1 = vector.load %arg2[%c0_1, %c0_2] : memref<8x256xf32, #tpu.memory_space<vmem>>, vector<8x256xf32>
    %c0_3 = arith.constant 0 : index
    %c0_4 = arith.constant 0 : index
    %2 = vector.load %arg3[%c0_3, %c0_4] : memref<8x8xf32, #tpu.memory_space<vmem>>, vector<8x8xf32>
    %c0_5 = arith.constant 0 : index
    %c0_6 = arith.constant 0 : index
    %3 = vector.load %arg4[%c0_5, %c0_6] : memref<1x32xf32, #tpu.memory_space<vmem>>, vector<1x32xf32>
    %c0_7 = arith.constant 0 : index
    %c0_8 = arith.constant 0 : index
    %4 = vector.load %arg5[%c0_7, %c0_8] : memref<1x256xf32, #tpu.memory_space<vmem>>, vector<1x256xf32>
    %5 = vector.broadcast %3 : vector<1x32xf32> to vector<8x32xf32>
    %6 = arith.mulf %0, %5 : vector<8x32xf32>
    %cst = arith.constant dense<0.000000e+00> : vector<8xf32>
    %7 = vector.multi_reduction <add>, %6, %cst [1] : vector<8x32xf32> to vector<8xf32>
    %8 = vector.shape_cast %7 : vector<8xf32> to vector<8x1xf32>
    %9 = vector.broadcast %4 : vector<1x256xf32> to vector<8x256xf32>
    %10 = arith.mulf %1, %9 : vector<8x256xf32>
    %11 = vector.extract_strided_slice %10 {offsets = [0, 0], sizes = [8, 32], strides = [1, 1]} : vector<8x256xf32> to vector<8x32xf32>
    %cst_9 = arith.constant dense<0.000000e+00> : vector<8xf32>
    %12 = vector.multi_reduction <add>, %11, %cst_9 [1] : vector<8x32xf32> to vector<8xf32>
    %13 = vector.shape_cast %12 : vector<8xf32> to vector<8x1xf32>
    %14 = arith.addf %8, %13 : vector<8x1xf32>
    %cst_10 = arith.constant 0.000000e+00 : f32
    %15 = vector.broadcast %cst_10 : f32 to vector<8x1xf32>
    %16 = arith.cmpf ogt, %14, %15 : vector<8x1xf32>
    %cst_11 = arith.constant 2.000000e-01 : f32
    %17 = vector.broadcast %cst_11 : f32 to vector<8x1xf32>
    %18 = arith.mulf %17, %14 : vector<8x1xf32>
    %19 = arith.select %16, %14, %18 : vector<8x1xi1>, vector<8x1xf32>
    %20 = vector.extract_strided_slice %2 {offsets = [0, 0], sizes = [8, 1], strides = [1, 1]} : vector<8x8xf32> to vector<8x1xf32>
    %cst_12 = arith.constant 0.000000e+00 : f32
    %21 = vector.broadcast %cst_12 : f32 to vector<8x1xf32>
    %22 = arith.cmpf ogt, %20, %21 : vector<8x1xf32>
    %cst_13 = arith.constant -9.000000e+15 : f32
    %23 = vector.broadcast %cst_13 : f32 to vector<8x1xf32>
    %24 = arith.select %22, %19, %23 : vector<8x1xi1>, vector<8x1xf32>
    %25 = vector.extract_strided_slice %10 {offsets = [0, 32], sizes = [8, 32], strides = [1, 1]} : vector<8x256xf32> to vector<8x32xf32>
    %cst_14 = arith.constant dense<0.000000e+00> : vector<8xf32>
    %26 = vector.multi_reduction <add>, %25, %cst_14 [1] : vector<8x32xf32> to vector<8xf32>
    %27 = vector.shape_cast %26 : vector<8xf32> to vector<8x1xf32>
    %28 = arith.addf %8, %27 : vector<8x1xf32>
    %cst_15 = arith.constant 0.000000e+00 : f32
    %29 = vector.broadcast %cst_15 : f32 to vector<8x1xf32>
    %30 = arith.cmpf ogt, %28, %29 : vector<8x1xf32>
    %cst_16 = arith.constant 2.000000e-01 : f32
    %31 = vector.broadcast %cst_16 : f32 to vector<8x1xf32>
    %32 = arith.mulf %31, %28 : vector<8x1xf32>
    %33 = arith.select %30, %28, %32 : vector<8x1xi1>, vector<8x1xf32>
    %34 = vector.extract_strided_slice %2 {offsets = [0, 1], sizes = [8, 1], strides = [1, 1]} : vector<8x8xf32> to vector<8x1xf32>
    %cst_17 = arith.constant 0.000000e+00 : f32
    %35 = vector.broadcast %cst_17 : f32 to vector<8x1xf32>
    %36 = arith.cmpf ogt, %34, %35 : vector<8x1xf32>
    %cst_18 = arith.constant -9.000000e+15 : f32
    %37 = vector.broadcast %cst_18 : f32 to vector<8x1xf32>
    %38 = arith.select %36, %33, %37 : vector<8x1xi1>, vector<8x1xf32>
    %39 = vector.extract_strided_slice %10 {offsets = [0, 64], sizes = [8, 32], strides = [1, 1]} : vector<8x256xf32> to vector<8x32xf32>
    %cst_19 = arith.constant dense<0.000000e+00> : vector<8xf32>
    %40 = vector.multi_reduction <add>, %39, %cst_19 [1] : vector<8x32xf32> to vector<8xf32>
    %41 = vector.shape_cast %40 : vector<8xf32> to vector<8x1xf32>
    %42 = arith.addf %8, %41 : vector<8x1xf32>
    %cst_20 = arith.constant 0.000000e+00 : f32
    %43 = vector.broadcast %cst_20 : f32 to vector<8x1xf32>
    %44 = arith.cmpf ogt, %42, %43 : vector<8x1xf32>
    %cst_21 = arith.constant 2.000000e-01 : f32
    %45 = vector.broadcast %cst_21 : f32 to vector<8x1xf32>
    %46 = arith.mulf %45, %42 : vector<8x1xf32>
    %47 = arith.select %44, %42, %46 : vector<8x1xi1>, vector<8x1xf32>
    %48 = vector.extract_strided_slice %2 {offsets = [0, 2], sizes = [8, 1], strides = [1, 1]} : vector<8x8xf32> to vector<8x1xf32>
    %cst_22 = arith.constant 0.000000e+00 : f32
    %49 = vector.broadcast %cst_22 : f32 to vector<8x1xf32>
    %50 = arith.cmpf ogt, %48, %49 : vector<8x1xf32>
    %cst_23 = arith.constant -9.000000e+15 : f32
    %51 = vector.broadcast %cst_23 : f32 to vector<8x1xf32>
    %52 = arith.select %50, %47, %51 : vector<8x1xi1>, vector<8x1xf32>
    %53 = vector.extract_strided_slice %10 {offsets = [0, 96], sizes = [8, 32], strides = [1, 1]} : vector<8x256xf32> to vector<8x32xf32>
    %cst_24 = arith.constant dense<0.000000e+00> : vector<8xf32>
    %54 = vector.multi_reduction <add>, %53, %cst_24 [1] : vector<8x32xf32> to vector<8xf32>
    %55 = vector.shape_cast %54 : vector<8xf32> to vector<8x1xf32>
    %56 = arith.addf %8, %55 : vector<8x1xf32>
    %cst_25 = arith.constant 0.000000e+00 : f32
    %57 = vector.broadcast %cst_25 : f32 to vector<8x1xf32>
    %58 = arith.cmpf ogt, %56, %57 : vector<8x1xf32>
    %cst_26 = arith.constant 2.000000e-01 : f32
    %59 = vector.broadcast %cst_26 : f32 to vector<8x1xf32>
    %60 = arith.mulf %59, %56 : vector<8x1xf32>
    %61 = arith.select %58, %56, %60 : vector<8x1xi1>, vector<8x1xf32>
    %62 = vector.extract_strided_slice %2 {offsets = [0, 3], sizes = [8, 1], strides = [1, 1]} : vector<8x8xf32> to vector<8x1xf32>
    %cst_27 = arith.constant 0.000000e+00 : f32
    %63 = vector.broadcast %cst_27 : f32 to vector<8x1xf32>
    %64 = arith.cmpf ogt, %62, %63 : vector<8x1xf32>
    %cst_28 = arith.constant -9.000000e+15 : f32
    %65 = vector.broadcast %cst_28 : f32 to vector<8x1xf32>
    %66 = arith.select %64, %61, %65 : vector<8x1xi1>, vector<8x1xf32>
    %67 = vector.extract_strided_slice %10 {offsets = [0, 128], sizes = [8, 32], strides = [1, 1]} : vector<8x256xf32> to vector<8x32xf32>
    %cst_29 = arith.constant dense<0.000000e+00> : vector<8xf32>
    %68 = vector.multi_reduction <add>, %67, %cst_29 [1] : vector<8x32xf32> to vector<8xf32>
    %69 = vector.shape_cast %68 : vector<8xf32> to vector<8x1xf32>
    %70 = arith.addf %8, %69 : vector<8x1xf32>
    %cst_30 = arith.constant 0.000000e+00 : f32
    %71 = vector.broadcast %cst_30 : f32 to vector<8x1xf32>
    %72 = arith.cmpf ogt, %70, %71 : vector<8x1xf32>
    %cst_31 = arith.constant 2.000000e-01 : f32
    %73 = vector.broadcast %cst_31 : f32 to vector<8x1xf32>
    %74 = arith.mulf %73, %70 : vector<8x1xf32>
    %75 = arith.select %72, %70, %74 : vector<8x1xi1>, vector<8x1xf32>
    %76 = vector.extract_strided_slice %2 {offsets = [0, 4], sizes = [8, 1], strides = [1, 1]} : vector<8x8xf32> to vector<8x1xf32>
    %cst_32 = arith.constant 0.000000e+00 : f32
    %77 = vector.broadcast %cst_32 : f32 to vector<8x1xf32>
    %78 = arith.cmpf ogt, %76, %77 : vector<8x1xf32>
    %cst_33 = arith.constant -9.000000e+15 : f32
    %79 = vector.broadcast %cst_33 : f32 to vector<8x1xf32>
    %80 = arith.select %78, %75, %79 : vector<8x1xi1>, vector<8x1xf32>
    %81 = vector.extract_strided_slice %10 {offsets = [0, 160], sizes = [8, 32], strides = [1, 1]} : vector<8x256xf32> to vector<8x32xf32>
    %cst_34 = arith.constant dense<0.000000e+00> : vector<8xf32>
    %82 = vector.multi_reduction <add>, %81, %cst_34 [1] : vector<8x32xf32> to vector<8xf32>
    %83 = vector.shape_cast %82 : vector<8xf32> to vector<8x1xf32>
    %84 = arith.addf %8, %83 : vector<8x1xf32>
    %cst_35 = arith.constant 0.000000e+00 : f32
    %85 = vector.broadcast %cst_35 : f32 to vector<8x1xf32>
    %86 = arith.cmpf ogt, %84, %85 : vector<8x1xf32>
    %cst_36 = arith.constant 2.000000e-01 : f32
    %87 = vector.broadcast %cst_36 : f32 to vector<8x1xf32>
    %88 = arith.mulf %87, %84 : vector<8x1xf32>
    %89 = arith.select %86, %84, %88 : vector<8x1xi1>, vector<8x1xf32>
    %90 = vector.extract_strided_slice %2 {offsets = [0, 5], sizes = [8, 1], strides = [1, 1]} : vector<8x8xf32> to vector<8x1xf32>
    %cst_37 = arith.constant 0.000000e+00 : f32
    %91 = vector.broadcast %cst_37 : f32 to vector<8x1xf32>
    %92 = arith.cmpf ogt, %90, %91 : vector<8x1xf32>
    %cst_38 = arith.constant -9.000000e+15 : f32
    %93 = vector.broadcast %cst_38 : f32 to vector<8x1xf32>
    %94 = arith.select %92, %89, %93 : vector<8x1xi1>, vector<8x1xf32>
    %95 = vector.extract_strided_slice %10 {offsets = [0, 192], sizes = [8, 32], strides = [1, 1]} : vector<8x256xf32> to vector<8x32xf32>
    %cst_39 = arith.constant dense<0.000000e+00> : vector<8xf32>
    %96 = vector.multi_reduction <add>, %95, %cst_39 [1] : vector<8x32xf32> to vector<8xf32>
    %97 = vector.shape_cast %96 : vector<8xf32> to vector<8x1xf32>
    %98 = arith.addf %8, %97 : vector<8x1xf32>
    %cst_40 = arith.constant 0.000000e+00 : f32
    %99 = vector.broadcast %cst_40 : f32 to vector<8x1xf32>
    %100 = arith.cmpf ogt, %98, %99 : vector<8x1xf32>
    %cst_41 = arith.constant 2.000000e-01 : f32
    %101 = vector.broadcast %cst_41 : f32 to vector<8x1xf32>
    %102 = arith.mulf %101, %98 : vector<8x1xf32>
    %103 = arith.select %100, %98, %102 : vector<8x1xi1>, vector<8x1xf32>
    %104 = vector.extract_strided_slice %2 {offsets = [0, 6], sizes = [8, 1], strides = [1, 1]} : vector<8x8xf32> to vector<8x1xf32>
    %cst_42 = arith.constant 0.000000e+00 : f32
    %105 = vector.broadcast %cst_42 : f32 to vector<8x1xf32>
    %106 = arith.cmpf ogt, %104, %105 : vector<8x1xf32>
    %cst_43 = arith.constant -9.000000e+15 : f32
    %107 = vector.broadcast %cst_43 : f32 to vector<8x1xf32>
    %108 = arith.select %106, %103, %107 : vector<8x1xi1>, vector<8x1xf32>
    %109 = vector.extract_strided_slice %10 {offsets = [0, 224], sizes = [8, 32], strides = [1, 1]} : vector<8x256xf32> to vector<8x32xf32>
    %cst_44 = arith.constant dense<0.000000e+00> : vector<8xf32>
    %110 = vector.multi_reduction <add>, %109, %cst_44 [1] : vector<8x32xf32> to vector<8xf32>
    %111 = vector.shape_cast %110 : vector<8xf32> to vector<8x1xf32>
    %112 = arith.addf %8, %111 : vector<8x1xf32>
    %cst_45 = arith.constant 0.000000e+00 : f32
    %113 = vector.broadcast %cst_45 : f32 to vector<8x1xf32>
    %114 = arith.cmpf ogt, %112, %113 : vector<8x1xf32>
    %cst_46 = arith.constant 2.000000e-01 : f32
    %115 = vector.broadcast %cst_46 : f32 to vector<8x1xf32>
    %116 = arith.mulf %115, %112 : vector<8x1xf32>
    %117 = arith.select %114, %112, %116 : vector<8x1xi1>, vector<8x1xf32>
    %118 = vector.extract_strided_slice %2 {offsets = [0, 7], sizes = [8, 1], strides = [1, 1]} : vector<8x8xf32> to vector<8x1xf32>
    %cst_47 = arith.constant 0.000000e+00 : f32
    %119 = vector.broadcast %cst_47 : f32 to vector<8x1xf32>
    %120 = arith.cmpf ogt, %118, %119 : vector<8x1xf32>
    %cst_48 = arith.constant -9.000000e+15 : f32
    %121 = vector.broadcast %cst_48 : f32 to vector<8x1xf32>
    %122 = arith.select %120, %117, %121 : vector<8x1xi1>, vector<8x1xf32>
    %123 = arith.maximumf %24, %38 : vector<8x1xf32>
    %124 = arith.maximumf %123, %52 : vector<8x1xf32>
    %125 = arith.maximumf %124, %66 : vector<8x1xf32>
    %126 = arith.maximumf %125, %80 : vector<8x1xf32>
    %127 = arith.maximumf %126, %94 : vector<8x1xf32>
    %128 = arith.maximumf %127, %108 : vector<8x1xf32>
    %129 = arith.maximumf %128, %122 : vector<8x1xf32>
    %cst_49 = arith.constant 0.000000e+00 : f32
    %130 = vector.broadcast %cst_49 : f32 to vector<8x1xf32>
    %cst_50 = arith.constant 0.000000e+00 : f32
    %131 = vector.broadcast %cst_50 : f32 to vector<8x32xf32>
    %132 = arith.subf %24, %129 : vector<8x1xf32>
    %133 = math.exp %132 : vector<8x1xf32>
    %134 = arith.addf %130, %133 : vector<8x1xf32>
    %135 = vector.extract_strided_slice %1 {offsets = [0, 0], sizes = [8, 32], strides = [1, 1]} : vector<8x256xf32> to vector<8x32xf32>
    %136 = vector.broadcast %133 : vector<8x1xf32> to vector<8x32xf32>
    %137 = arith.mulf %136, %135 : vector<8x32xf32>
    %138 = arith.addf %131, %137 : vector<8x32xf32>
    %139 = arith.subf %38, %129 : vector<8x1xf32>
    %140 = math.exp %139 : vector<8x1xf32>
    %141 = arith.addf %134, %140 : vector<8x1xf32>
    %142 = vector.extract_strided_slice %1 {offsets = [0, 32], sizes = [8, 32], strides = [1, 1]} : vector<8x256xf32> to vector<8x32xf32>
    %143 = vector.broadcast %140 : vector<8x1xf32> to vector<8x32xf32>
    %144 = arith.mulf %143, %142 : vector<8x32xf32>
    %145 = arith.addf %138, %144 : vector<8x32xf32>
    %146 = arith.subf %52, %129 : vector<8x1xf32>
    %147 = math.exp %146 : vector<8x1xf32>
    %148 = arith.addf %141, %147 : vector<8x1xf32>
    %149 = vector.extract_strided_slice %1 {offsets = [0, 64], sizes = [8, 32], strides = [1, 1]} : vector<8x256xf32> to vector<8x32xf32>
    %150 = vector.broadcast %147 : vector<8x1xf32> to vector<8x32xf32>
    %151 = arith.mulf %150, %149 : vector<8x32xf32>
    %152 = arith.addf %145, %151 : vector<8x32xf32>
    %153 = arith.subf %66, %129 : vector<8x1xf32>
    %154 = math.exp %153 : vector<8x1xf32>
    %155 = arith.addf %148, %154 : vector<8x1xf32>
    %156 = vector.extract_strided_slice %1 {offsets = [0, 96], sizes = [8, 32], strides = [1, 1]} : vector<8x256xf32> to vector<8x32xf32>
    %157 = vector.broadcast %154 : vector<8x1xf32> to vector<8x32xf32>
    %158 = arith.mulf %157, %156 : vector<8x32xf32>
    %159 = arith.addf %152, %158 : vector<8x32xf32>
    %160 = arith.subf %80, %129 : vector<8x1xf32>
    %161 = math.exp %160 : vector<8x1xf32>
    %162 = arith.addf %155, %161 : vector<8x1xf32>
    %163 = vector.extract_strided_slice %1 {offsets = [0, 128], sizes = [8, 32], strides = [1, 1]} : vector<8x256xf32> to vector<8x32xf32>
    %164 = vector.broadcast %161 : vector<8x1xf32> to vector<8x32xf32>
    %165 = arith.mulf %164, %163 : vector<8x32xf32>
    %166 = arith.addf %159, %165 : vector<8x32xf32>
    %167 = arith.subf %94, %129 : vector<8x1xf32>
    %168 = math.exp %167 : vector<8x1xf32>
    %169 = arith.addf %162, %168 : vector<8x1xf32>
    %170 = vector.extract_strided_slice %1 {offsets = [0, 160], sizes = [8, 32], strides = [1, 1]} : vector<8x256xf32> to vector<8x32xf32>
    %171 = vector.broadcast %168 : vector<8x1xf32> to vector<8x32xf32>
    %172 = arith.mulf %171, %170 : vector<8x32xf32>
    %173 = arith.addf %166, %172 : vector<8x32xf32>
    %174 = arith.subf %108, %129 : vector<8x1xf32>
    %175 = math.exp %174 : vector<8x1xf32>
    %176 = arith.addf %169, %175 : vector<8x1xf32>
    %177 = vector.extract_strided_slice %1 {offsets = [0, 192], sizes = [8, 32], strides = [1, 1]} : vector<8x256xf32> to vector<8x32xf32>
    %178 = vector.broadcast %175 : vector<8x1xf32> to vector<8x32xf32>
    %179 = arith.mulf %178, %177 : vector<8x32xf32>
    %180 = arith.addf %173, %179 : vector<8x32xf32>
    %181 = arith.subf %122, %129 : vector<8x1xf32>
    %182 = math.exp %181 : vector<8x1xf32>
    %183 = arith.addf %176, %182 : vector<8x1xf32>
    %184 = vector.extract_strided_slice %1 {offsets = [0, 224], sizes = [8, 32], strides = [1, 1]} : vector<8x256xf32> to vector<8x32xf32>
    %185 = vector.broadcast %182 : vector<8x1xf32> to vector<8x32xf32>
    %186 = arith.mulf %185, %184 : vector<8x32xf32>
    %187 = arith.addf %180, %186 : vector<8x32xf32>
    %188 = tpu.reciprocal %183 {approx = true} : vector<8x1xf32> -> vector<8x1xf32>
    %189 = arith.mulf %183, %188 : vector<8x1xf32>
    %cst_51 = arith.constant 2.000000e+00 : f32
    %190 = vector.broadcast %cst_51 : f32 to vector<8x1xf32>
    %191 = arith.subf %190, %189 : vector<8x1xf32>
    %192 = arith.mulf %188, %191 : vector<8x1xf32>
    %193 = arith.mulf %183, %192 : vector<8x1xf32>
    %cst_52 = arith.constant 2.000000e+00 : f32
    %194 = vector.broadcast %cst_52 : f32 to vector<8x1xf32>
    %195 = arith.subf %194, %193 : vector<8x1xf32>
    %196 = arith.mulf %192, %195 : vector<8x1xf32>
    %197 = vector.broadcast %196 : vector<8x1xf32> to vector<8x32xf32>
    %198 = arith.mulf %187, %197 : vector<8x32xf32>
    %199 = arith.addf %198, %0 : vector<8x32xf32>
    %c0_53 = arith.constant 0 : index
    %c0_54 = arith.constant 0 : index
    %200 = vector.load %arg6[%c0_53, %c0_54] : memref<8x32xf32, #tpu.memory_space<vmem>>, vector<8x32xf32>
    tpu.vector_store %arg6[%c0_53, %c0_54], %199 {strides = array<i32>} : memref<8x32xf32, #tpu.memory_space<vmem>>, vector<8x32xf32>,
    return
  }
  func.func @transform_0(%arg0: i32) -> (i32, i32) {
    %c0_i32 = arith.constant 0 : i32
    %c0_i32_0 = arith.constant 0 : i32
    return %arg0, %c0_i32 : i32, i32
  }
  func.func @transform_1(%arg0: i32) -> (i32, i32) {
    %c0_i32 = arith.constant 0 : i32
    %c0_i32_0 = arith.constant 0 : i32
    return %arg0, %c0_i32 : i32, i32
  }
  func.func @transform_2(%arg0: i32) -> (i32, i32) {
    %c0_i32 = arith.constant 0 : i32
    %c0_i32_0 = arith.constant 0 : i32
    return %arg0, %c0_i32 : i32, i32
  }
  func.func @transform_3(%arg0: i32) -> (i32, i32) {
    %c0_i32 = arith.constant 0 : i32
    %c0_i32_0 = arith.constant 0 : i32
    %c0_i32_1 = arith.constant 0 : i32
    return %c0_i32, %c0_i32_0 : i32, i32
  }
  func.func @transform_4(%arg0: i32) -> (i32, i32) {
    %c0_i32 = arith.constant 0 : i32
    %c0_i32_0 = arith.constant 0 : i32
    %c0_i32_1 = arith.constant 0 : i32
    return %c0_i32, %c0_i32_0 : i32, i32
  }
  func.func @transform_5(%arg0: i32) -> (i32, i32) {
    %c0_i32 = arith.constant 0 : i32
    %c0_i32_0 = arith.constant 0 : i32
    return %arg0, %c0_i32 : i32, i32
  }
}

</mosaic_0001>

<llo_original>
// kernel: tpu_custom_call.1
$region0: #{tpu_custom_call.1}
  #allocation0 [shape = 'u32[]', space=smem, size = 0x4, offset = 0x4, fixed_abs, tag = 'smem constant byte address 0x4 - core index']
  #allocation1 [shape = 'u32[144,128]{1,0:T(1,128)}', space=vmem, size = 0x12000, scoped, tag = 'internal scratch']
  %s0 = inlined_call_operand.vmem [shape: f32[16,32], index: 0, kind: input, shape index: {}]
  %s1 = inlined_call_operand.hbm [shape: f32[16,256], index: 1, kind: input, shape index: {}]
  %s2 = inlined_call_operand.vmem [shape: f32[16,8], index: 2, kind: input, shape index: {}]
  %s3 = inlined_call_operand.vmem [shape: f32[1,32], index: 3, kind: input, shape index: {}]
  %s4 = inlined_call_operand.vmem [shape: f32[1,256], index: 4, kind: input, shape index: {}]
  %s5 = inlined_call_operand.hbm [shape: f32[16,32], index: 5, kind: output, shape index: {}]
  %s6 = sld [smem:[#allocation0]]
  $region57: #{tpu_custom_call.1} parent=0
    _
  %s8 = ssub.s32 1, %s6
  %s9 = scalar_select 0, %s8, %s6
  $region1: #{tpu_custom_call.1} parent=0
    #allocation2 [shape = 'u8[16384]{0}', space=vmem, size = 0x4000, scoped, tag = 'input window, operand 1']
    #allocation3 [shape = 's32[2]{0}', space=sflag, size = 0x8, scoped, tag = 'scoped memory for tpu_custom_call.1']
    #allocation4 [shape = 's32[2]{0}', space=sflag, size = 0x8, scoped, tag = 'scoped memory for tpu_custom_call.1']
    #allocation5 [shape = 'u8[8192]{0}', space=vmem, size = 0x2000, scoped, tag = 'output window, operand 0']
    %10 = vsyncpa [#allocation3], 0
    %s11 = scalar_lea.sflag [#allocation3], 1
    %12 = vsyncpa %s11, 0
    %13 = vsyncpa [#allocation4], 0
    %s14 = scalar_lea.sflag [#allocation4], 1
    %15 = vsyncpa %s14, 0
    loop: start=0, step=1, limit=4
    $region2: #{tpu_custom_call.1} parent=1 // loop_pre_header
      _
    $region3: #{tpu_custom_call.1} parent=1 // loop_header
      %s17 = sphi 0, %s21
      %p18 = scmp.ge.s32.totalorder %s17, 4
      %s27 = sphi 0, %s29
      %s30 = sphi 0, %s27
      %s31 = sphi 0, %s30
      %s47 = sphi 0, %s31
      %s53 = sphi 0, %s55
      %s56 = sphi 0, %s53
      %s57 = sphi 0, %s56
      %s73 = sphi 0, %s57
      %s79 = sphi 0, %s81
      %s82 = sphi 0, %s79
      %s83 = sphi 0, %s82
      %s99 = sphi 0, %s83
      %s103 = sphi 0, %s103
      %s105 = sphi 0, %s103
      %s106 = sphi 0, %s105
      %s120 = sphi 0, %s106
      %s124 = sphi 0, %s124
      %s126 = sphi 0, %s124
      %s127 = sphi 0, %s126
      %s141 = sphi 0, %s127
      %s147 = sphi 0, %s149
      %s150 = sphi 0, %s147
      %s151 = sphi 0, %s150
      %s167 = sphi 0, %s151
    $region4: #{tpu_custom_call.1} parent=1 // loop_header_branch
      %20 = sbr.rel (%p18) target = $region8
    $region5: #{tpu_custom_call.1} parent=1 // loop_body
      %s22 = ssub.s32 %s17, 1
      %s23 = ssub.s32 %s17, 2
      %s24 = sadd.s32 %s17, 1
      %s25 = ssub.s32 %s17, %s24
      %p26 = scmp.eq.s32.totalorder %s25, 0
      %s28 = sadd.s32 %s27, 1
      %s29 = scalar_select %p26, %s27, %s28
      %p32 = pneg %p26
      %p33 = scmp.eq.s32.totalorder %s17, 1
      %p34 = por %p32, %p33
      %p35 = scmp.ne.s32.totalorder %s27, %s30
      %p36 = scmp.eq.s32.totalorder %s17, 0
      %p37 = por %p35, %p36
      %p38 = scmp.ne.s32.totalorder %s27, %s30
      %p39 = scmp.eq.s32.totalorder %s22, 1
      %p40 = por %p38, %p39
      %p41 = scmp.ne.s32.totalorder %s30, %s31
      %p42 = scmp.eq.s32.totalorder %s22, 0
      %p43 = por %p41, %p42
      %p44 = scmp.ne.s32.totalorder %s30, %s31
      %p45 = scmp.eq.s32.totalorder %s23, 1
      %p46 = por %p44, %p45
      %p48 = scmp.ne.s32.totalorder %s31, %s47
      %p49 = scmp.eq.s32.totalorder %s23, 0
      %p50 = por %p48, %p49
      %s51 = ssub.s32 %s17, %s24
      %p52 = scmp.eq.s32.totalorder %s51, 0
      %s54 = sadd.s32 %s53, 1
      %s55 = scalar_select %p52, %s53, %s54
      %p58 = pneg %p52
      %p59 = scmp.eq.s32.totalorder %s17, 1
      %p60 = por %p58, %p59
      %p61 = scmp.ne.s32.totalorder %s53, %s56
      %p62 = scmp.eq.s32.totalorder %s17, 0
      %p63 = por %p61, %p62
      %p64 = scmp.ne.s32.totalorder %s53, %s56
      %p65 = scmp.eq.s32.totalorder %s22, 1
      %p66 = por %p64, %p65
      %p67 = scmp.ne.s32.totalorder %s56, %s57
      %p68 = scmp.eq.s32.totalorder %s22, 0
      %p69 = por %p67, %p68
      %p70 = scmp.ne.s32.totalorder %s56, %s57
      %p71 = scmp.eq.s32.totalorder %s23, 1
      %p72 = por %p70, %p71
      %p74 = scmp.ne.s32.totalorder %s57, %s73
      %p75 = scmp.eq.s32.totalorder %s23, 0
      %p76 = por %p74, %p75
      %s77 = ssub.s32 %s17, %s24
      %p78 = scmp.eq.s32.totalorder %s77, 0
      %s80 = sadd.s32 %s79, 1
      %s81 = scalar_select %p78, %s79, %s80
      %p84 = pneg %p78
      %p85 = scmp.eq.s32.totalorder %s17, 1
      %p86 = por %p84, %p85
      %p87 = scmp.ne.s32.totalorder %s79, %s82
      %p88 = scmp.eq.s32.totalorder %s17, 0
      %p89 = por %p87, %p88
      %p90 = scmp.ne.s32.totalorder %s79, %s82
      %p91 = scmp.eq.s32.totalorder %s22, 1
      %p92 = por %p90, %p91
      %p93 = scmp.ne.s32.totalorder %s82, %s83
      %p94 = scmp.eq.s32.totalorder %s22, 0
      %p95 = por %p93, %p94
      %p96 = scmp.ne.s32.totalorder %s82, %s83
      %p97 = scmp.eq.s32.totalorder %s23, 1
      %p98 = por %p96, %p97
      %p100 = scmp.ne.s32.totalorder %s83, %s99
      %p101 = scmp.eq.s32.totalorder %s23, 0
      %p102 = por %p100, %p101
      %s104 = sadd.s32 %s103, 1
      %p107 = scmp.eq.s32.totalorder %s17, 1
      %p108 = scmp.ne.s32.totalorder %s103, %s105
      %p109 = scmp.eq.s32.totalorder %s17, 0
      %p110 = por %p108, %p109
      %p111 = scmp.ne.s32.totalorder %s103, %s105
      %p112 = scmp.eq.s32.totalorder %s22, 1
      %p113 = por %p111, %p112
      %p114 = scmp.ne.s32.totalorder %s105, %s106
      %p115 = scmp.eq.s32.totalorder %s22, 0
      %p116 = por %p114, %p115
      %p117 = scmp.ne.s32.totalorder %s105, %s106
      %p118 = scmp.eq.s32.totalorder %s23, 1
      %p119 = por %p117, %p118
      %p121 = scmp.ne.s32.totalorder %s106, %s120
      %p122 = scmp.eq.s32.totalorder %s23, 0
      %p123 = por %p121, %p122
      %s125 = sadd.s32 %s124, 1
      %p128 = scmp.eq.s32.totalorder %s17, 1
      %p129 = scmp.ne.s32.totalorder %s124, %s126
      %p130 = scmp.eq.s32.totalorder %s17, 0
      %p131 = por %p129, %p130
      %p132 = scmp.ne.s32.totalorder %s124, %s126
      %p133 = scmp.eq.s32.totalorder %s22, 1
      %p134 = por %p132, %p133
      %p135 = scmp.ne.s32.totalorder %s126, %s127
      %p136 = scmp.eq.s32.totalorder %s22, 0
      %p137 = por %p135, %p136
      %p138 = scmp.ne.s32.totalorder %s126, %s127
      %p139 = scmp.eq.s32.totalorder %s23, 1
      %p140 = por %p138, %p139
      %p142 = scmp.ne.s32.totalorder %s127, %s141
      %p143 = scmp.eq.s32.totalorder %s23, 0
      %p144 = por %p142, %p143
      %s145 = ssub.s32 %s17, %s24
      %p146 = scmp.eq.s32.totalorder %s145, 0
      %s148 = sadd.s32 %s147, 1
      %s149 = scalar_select %p146, %s147, %s148
      %p152 = pneg %p146
      %p153 = scmp.eq.s32.totalorder %s17, 1
      %p154 = por %p152, %p153
      %p155 = scmp.ne.s32.totalorder %s147, %s150
      %p156 = scmp.eq.s32.totalorder %s17, 0
      %p157 = por %p155, %p156
      %p158 = scmp.ne.s32.totalorder %s147, %s150
      %p159 = scmp.eq.s32.totalorder %s22, 1
      %p160 = por %p158, %p159
      %p161 = scmp.ne.s32.totalorder %s150, %s151
      %p162 = scmp.eq.s32.totalorder %s22, 0
      %p163 = por %p161, %p162
      %p164 = scmp.ne.s32.totalorder %s150, %s151
      %p165 = scmp.eq.s32.totalorder %s23, 1
      %p166 = por %p164, %p165
      %p168 = scmp.ne.s32.totalorder %s151, %s167
      %p169 = scmp.eq.s32.totalorder %s23, 0
      %p170 = por %p168, %p169
      %p171 = scmp.le.s32.totalorder 1, %s17
      %p172 = scmp.lt.s32.totalorder %s17, 3
      %p173 = pnand %p171, %p172
      %p174 = pneg %p173
      // Predicated region
      $region9: #{tpu_custom_call.1} parent=5 // pred_check
        _
      $region10: #{tpu_custom_call.1} parent=5 // pred_check_branch
        %176 = sbr.rel (%p173) target = $region12
      $region11: #{tpu_custom_call.1} parent=5 // pred_region
        %s177 = ssub.s32 %s17, 1
        // Predicated region
        $region13: #{tpu_custom_call.1} parent=11 // pred_check
          %p178 = pneg %p116
        $region14: #{tpu_custom_call.1} parent=11 // pred_check_branch
          %180 = sbr.rel (%p178) target = $region16
        $region15: #{tpu_custom_call.1} parent=11 // pred_region
          _
        $region16: #{tpu_custom_call.1} parent=11 // pred_fallthru
          _
        // Predicated region
        $region17: #{tpu_custom_call.1} parent=11 // pred_check
          %p181 = pneg %p137
        $region18: #{tpu_custom_call.1} parent=11 // pred_check_branch
          %183 = sbr.rel (%p181) target = $region20
        $region19: #{tpu_custom_call.1} parent=11 // pred_region
          _
        $region20: #{tpu_custom_call.1} parent=11 // pred_fallthru
          _
      $region12: #{tpu_custom_call.1} parent=5 // pred_fallthru
        _
      %p184 = scmp.lt.s32.totalorder %s17, 2
      // Predicated region
      $region21: #{tpu_custom_call.1} parent=5 // pred_check
        %p185 = pneg %p184
      $region22: #{tpu_custom_call.1} parent=5 // pred_check_branch
        %187 = sbr.rel (%p185) target = $region24
      $region23: #{tpu_custom_call.1} parent=5 // pred_region
        // Predicated region
        $region25: #{tpu_custom_call.1} parent=23 // pred_check
          %p188 = pneg %p37
        $region26: #{tpu_custom_call.1} parent=23 // pred_check_branch
          %190 = sbr.rel (%p188) target = $region28
        $region27: #{tpu_custom_call.1} parent=23 // pred_region
          %p191 = scmp.lt.s32.totalorder %s17, 1
          %s192 = scalar_select %p191, %s17, 1
          %s193 = smul.addr %s192, 8
          %s194 = scalar_lea.vmem %s0, %s193
        $region28: #{tpu_custom_call.1} parent=23 // pred_fallthru
          _
        // Predicated region
        $region29: #{tpu_custom_call.1} parent=23 // pred_check
          %p195 = pneg %p63
        $region30: #{tpu_custom_call.1} parent=23 // pred_check_branch
          %197 = sbr.rel (%p195) target = $region32
        $region31: #{tpu_custom_call.1} parent=23 // pred_region
          %s198 = sand.u32 %s53, 1
          %s199 = scalar_lea.sflag [#allocation3], %s198
          %s200 = sand.u32 %s53, 1
          %s201 = smul.addr %s200, 16
          %s202 = scalar_lea.vmem [#allocation2], %s201
          %s204 = ssub.s32 256, 256
          %205 = vsyncadd %s199, %s204
          %s206 = smul.addr %s17, 2
          %s207 = smul.addr %s206, 128
          %s208 = scalar_lea.hbm %s1, %s207
          %s210 = sshll.u32 %s202, 4
          %s211 = int_to_ptr.vmem [resolvable:$true] %s210
          %213 = dma.hbm_to_vmem [thread:$0]  %s208, 256, %s211, %s199
        $region32: #{tpu_custom_call.1} parent=23 // pred_fallthru
          _
        // Predicated region
        $region33: #{tpu_custom_call.1} parent=23 // pred_check
          %p214 = pneg %p89
        $region34: #{tpu_custom_call.1} parent=23 // pred_check_branch
          %216 = sbr.rel (%p214) target = $region36
        $region35: #{tpu_custom_call.1} parent=23 // pred_region
          %p217 = scmp.lt.s32.totalorder %s17, 1
          %s218 = scalar_select %p217, %s17, 1
          %s219 = smul.addr %s218, 8
          %s220 = scalar_lea.vmem %s2, %s219
        $region36: #{tpu_custom_call.1} parent=23 // pred_fallthru
          _
      $region24: #{tpu_custom_call.1} parent=5 // pred_fallthru
        _
      %p221 = scmp.le.s32.totalorder 1, %s17
      %p222 = scmp.lt.s32.totalorder %s17, 3
      %p223 = pnand %p221, %p222
      %p224 = pneg %p223
      // Predicated region
      $region37: #{tpu_custom_call.1} parent=5 // pred_check
        _
      $region38: #{tpu_custom_call.1} parent=5 // pred_check_branch
        %226 = sbr.rel (%p223) target = $region40
      $region39: #{tpu_custom_call.1} parent=5 // pred_region
        %s227 = ssub.s32 %s17, 1
        %s228 = sand.u32 %s56, 1
        %s229 = scalar_lea.sflag [#allocation3], %s228
        %s230 = sand.u32 %s56, 1
        %s231 = smul.addr %s230, 16
        %s232 = scalar_lea.vmem [#allocation2], %s231
        // Predicated region
        $region41: #{tpu_custom_call.1} parent=39 // pred_check
          %p233 = pneg %p69
        $region42: #{tpu_custom_call.1} parent=39 // pred_check_branch
          %235 = sbr.rel (%p233) target = $region44
        $region43: #{tpu_custom_call.1} parent=39 // pred_region
          %236 = dma.done %s229, 256
        $region44: #{tpu_custom_call.1} parent=39 // pred_fallthru
          _
        %p237 = scmp.lt.s32.totalorder %s22, 1
        %s238 = scalar_select %p237, %s22, 1
        %s239 = smul.addr %s238, 8
        %s240 = scalar_lea.vmem %s0, %s239
        %p241 = pneg %p43
        %p242 = pneg %p40
        %s243 = sand.u32 %s56, 1
        %s244 = scalar_lea.sflag [#allocation3], %s243
        %s245 = sand.u32 %s56, 1
        %s246 = smul.addr %s245, 16
        %s247 = scalar_lea.vmem [#allocation2], %s246
        %p248 = pneg %p69
        %p249 = pneg %p66
        %p250 = scmp.lt.s32.totalorder %s22, 1
        %s251 = scalar_select %p250, %s22, 1
        %s252 = smul.addr %s251, 8
        %s253 = scalar_lea.vmem %s2, %s252
        %p254 = pneg %p95
        %p255 = pneg %p92
        %p256 = pneg %p116
        %p257 = pneg %p113
        %p258 = pneg %p137
        %p259 = pneg %p134
        %p260 = pneg %p163
        %p261 = pneg %p160
        %s262 = sand.u32 %s150, 1
        %s263 = scalar_lea.sflag [#allocation4], %s262
        %s264 = sand.u32 %s150, 1
        %s265 = smul.addr %s264, 8
        %s266 = scalar_lea.vmem [#allocation5], %s265
        %p267 = scmp.lt.s32.totalorder %s22, 1
        %s268 = scalar_select %p267, %s22, 1
        %s269 = smul.addr %s268, 8
        %s270 = scalar_lea.vmem %s0, %s269
        %p271 = scmp.lt.s32.totalorder %s22, 1
        %s272 = scalar_select %p271, %s22, 1
        %s273 = smul.addr %s272, 8
        %s274 = scalar_lea.vmem %s2, %s273
        %v275 = vld [vmem:[%s270] sm:$0xff]
        %v276 = vld [vmem:[%s232] sm:$0xff]
        %v277 = vld [vmem:[%s232 + $0x8] sm:$0xff]
        %v278 = vld [vmem:[%s274] sm:$0xff]
        %v279 = vld [vmem:[%s3] sm:$0x1]
        %v280 = vld [vmem:[%s4] sm:$0x3]
        %v282 = vlaneseq
        %v283 = vshrl.u32 %v282, 7
        %v284 = vsub.s32 0, %v283
        %v285 = vrot.slane %v279, %v284
        %v287 = vmul.f32 %v275, %v285
        %vm288 = vcmask 261120
        %v289 = vsel %vm288, %v287, 0.0
        %290 = vadd.xlane.f32.xlu0 %v289
        %v291 = vpop.xlane.xlu0 %290
        %v293 = vlaneseq
        %v294 = vshrl.u32 %v293, 7
        %v295 = vsub.s32 0, %v294
        %v296 = vrot.slane %v280, %v295
        %v297 = vlaneseq
        %v298 = vshrl.u32 %v297, 7
        %v299 = vsub.s32 1, %v298
        %v300 = vrot.slane %v280, %v299
        %v303 = vmul.f32 %v276, %v296
        %v304 = vmul.f32 %v277, %v300
        %v305 = vsel %vm288, %v303, 0.0
        %306 = vadd.xlane.f32.xlu0 %v305
        %v307 = vpop.xlane.xlu0 %306
        %v308 = vadd.f32 %v291, %v307
        %vm309 = vcmp.gt.f32.partialorder %v308, 0.0
        %v310 = vmul.f32 %v308, 0.2
        %v311 = vsel %vm309, %v308, %v310
        %vm312 = vcmp.gt.f32.partialorder %v278, 0.0
        %v313 = vsel %vm312, %v311, -9e+15
        %315 = vrot.lane.b32.xlu0 %v303, 96
        %v316 = vpop.permute.xlu0 %315
        %v318 = vsel %vm288, %v316, 0.0
        %319 = vadd.xlane.f32.xlu0 %v318
        %v320 = vpop.xlane.xlu0 %319
        %v321 = vadd.f32 %v291, %v320
        %vm322 = vcmp.gt.f32.partialorder %v321, 0.0
        %v323 = vmul.f32 %v321, 0.2
        %v324 = vsel %vm322, %v321, %v323
        %v325 = vsel %vm312, %v324, -9e+15
        %326 = vrot.lane.b32.xlu0 %v303, 64
        %v327 = vpop.permute.xlu0 %326
        %v329 = vsel %vm288, %v327, 0.0
        %330 = vadd.xlane.f32.xlu0 %v329
        %v331 = vpop.xlane.xlu0 %330
        %v332 = vadd.f32 %v291, %v331
        %vm333 = vcmp.gt.f32.partialorder %v332, 0.0
        %v334 = vmul.f32 %v332, 0.2
        %v335 = vsel %vm333, %v332, %v334
        %v336 = vsel %vm312, %v335, -9e+15
        %337 = vrot.lane.b32.xlu0 %v303, 32
        %v338 = vpop.permute.xlu0 %337
        %v340 = vsel %vm288, %v338, 0.0
        %341 = vadd.xlane.f32.xlu0 %v340
        %v342 = vpop.xlane.xlu0 %341
        %v343 = vadd.f32 %v291, %v342
        %vm344 = vcmp.gt.f32.partialorder %v343, 0.0
        %v345 = vmul.f32 %v343, 0.2
        %v346 = vsel %vm344, %v343, %v345
        %v347 = vsel %vm312, %v346, -9e+15
        %v348 = vsel %vm288, %v304, 0.0
        %349 = vadd.xlane.f32.xlu0 %v348
        %v350 = vpop.xlane.xlu0 %349
        %v351 = vadd.f32 %v291, %v350
        %vm352 = vcmp.gt.f32.partialorder %v351, 0.0
        %v353 = vmul.f32 %v351, 0.2
        %v354 = vsel %vm352, %v351, %v353
        %v355 = vsel %vm312, %v354, -9e+15
        %357 = vrot.lane.b32.xlu0 %v304, 96
        %v358 = vpop.permute.xlu0 %357
        %v360 = vsel %vm288, %v358, 0.0
        %361 = vadd.xlane.f32.xlu0 %v360
        %v362 = vpop.xlane.xlu0 %361
        %v363 = vadd.f32 %v291, %v362
        %vm364 = vcmp.gt.f32.partialorder %v363, 0.0
        %v365 = vmul.f32 %v363, 0.2
        %v366 = vsel %vm364, %v363, %v365
        %v367 = vsel %vm312, %v366, -9e+15
        %368 = vrot.lane.b32.xlu0 %v304, 64
        %v369 = vpop.permute.xlu0 %368
        %v371 = vsel %vm288, %v369, 0.0
        %372 = vadd.xlane.f32.xlu0 %v371
        %v373 = vpop.xlane.xlu0 %372
        %v374 = vadd.f32 %v291, %v373
        %vm375 = vcmp.gt.f32.partialorder %v374, 0.0
        %v376 = vmul.f32 %v374, 0.2
        %v377 = vsel %vm375, %v374, %v376
        %v378 = vsel %vm312, %v377, -9e+15
        %379 = vrot.lane.b32.xlu0 %v304, 32
        %v380 = vpop.permute.xlu0 %379
        %v382 = vsel %vm288, %v380, 0.0
        %383 = vadd.xlane.f32.xlu0 %v382
        %v384 = vpop.xlane.xlu0 %383
        %v385 = vadd.f32 %v291, %v384
        %vm386 = vcmp.gt.f32.partialorder %v385, 0.0
        %v387 = vmul.f32 %v385, 0.2
        %v388 = vsel %vm386, %v385, %v387
        %v389 = vsel %vm312, %v388, -9e+15
        %391 = vrot.lane.b32.xlu0 %v325, 127
        %v392 = vpop.permute.xlu0 %391
        %v394 = vmax.f32 %v313, %v392
        %396 = vrot.lane.b32.xlu0 %v336, 126
        %v397 = vpop.permute.xlu0 %396
        %v399 = vmax.f32 %v394, %v397
        %401 = vrot.lane.b32.xlu0 %v347, 125
        %v402 = vpop.permute.xlu0 %401
        %v404 = vmax.f32 %v399, %v402
        %406 = vrot.lane.b32.xlu0 %v355, 124
        %v407 = vpop.permute.xlu0 %406
        %v409 = vmax.f32 %v404, %v407
        %411 = vrot.lane.b32.xlu0 %v367, 123
        %v412 = vpop.permute.xlu0 %411
        %v414 = vmax.f32 %v409, %v412
        %416 = vrot.lane.b32.xlu0 %v378, 122
        %v417 = vpop.permute.xlu0 %416
        %v419 = vmax.f32 %v414, %v417
        %421 = vrot.lane.b32.xlu0 %v389, 121
        %v422 = vpop.permute.xlu0 %421
        %v424 = vmax.f32 %v419, %v422
        %v425 = vsub.f32 %v313, %v424
        %v426 = vmul.f32 %v425, 1.442695
        %v427 = vpow.pop %v426
        %v428 = vadd.f32 %v427, 0.0
        %430 = vset.pattern.permute.xlu0 0
        %431 = vperm.xlu0 %430, %v427
        %v432 = vpop.permute.xlu0 %431
        %v434 = vmul.f32 %v432, %v276
        %v435 = vadd.f32 %v434, 0.0
        %437 = vrot.lane.b32.xlu0 %v424, 1
        %v438 = vpop.permute.xlu0 %437
        %v440 = vsub.f32 %v325, %v438
        %v441 = vmul.f32 %v440, 1.442695
        %v442 = vpow.pop %v441
        %444 = vrot.lane.b32.xlu0 %v442, 127
        %v445 = vpop.permute.xlu0 %444
        %v447 = vadd.f32 %v428, %v445
        %448 = vset.pattern.permute.xlu0 1
        %449 = vperm.xlu0 %448, %v442
        %v450 = vpop.permute.xlu0 %449
        %v452 = vmul.f32 %v450, %v276
        %454 = vrot.lane.b32.xlu0 %v452, 96
        %v455 = vpop.permute.xlu0 %454
        %v457 = vadd.f32 %v435, %v455
        %458 = vrot.lane.b32.xlu0 %v424, 2
        %v459 = vpop.permute.xlu0 %458
        %v461 = vsub.f32 %v336, %v459
        %v462 = vmul.f32 %v461, 1.442695
        %v463 = vpow.pop %v462
        %465 = vrot.lane.b32.xlu0 %v463, 126
        %v466 = vpop.permute.xlu0 %465
        %v468 = vadd.f32 %v447, %v466
        %469 = vset.pattern.permute.xlu0 2
        %470 = vperm.xlu0 %469, %v463
        %v471 = vpop.permute.xlu0 %470
        %v473 = vmul.f32 %v471, %v276
        %475 = vrot.lane.b32.xlu0 %v473, 64
        %v476 = vpop.permute.xlu0 %475
        %v478 = vadd.f32 %v457, %v476
        %479 = vrot.lane.b32.xlu0 %v424, 3
        %v480 = vpop.permute.xlu0 %479
        %v482 = vsub.f32 %v347, %v480
        %v483 = vmul.f32 %v482, 1.442695
        %v484 = vpow.pop %v483
        %486 = vrot.lane.b32.xlu0 %v484, 125
        %v487 = vpop.permute.xlu0 %486
        %v489 = vadd.f32 %v468, %v487
        %490 = vset.pattern.permute.xlu0 3
        %491 = vperm.xlu0 %490, %v484
        %v492 = vpop.permute.xlu0 %491
        %v494 = vmul.f32 %v492, %v276
        %496 = vrot.lane.b32.xlu0 %v494, 32
        %v497 = vpop.permute.xlu0 %496
        %v499 = vadd.f32 %v478, %v497
        %500 = vrot.lane.b32.xlu0 %v424, 4
        %v501 = vpop.permute.xlu0 %500
        %v503 = vsub.f32 %v355, %v501
        %v504 = vmul.f32 %v503, 1.442695
        %v505 = vpow.pop %v504
        %507 = vrot.lane.b32.xlu0 %v505, 124
        %v508 = vpop.permute.xlu0 %507
        %v510 = vadd.f32 %v489, %v508
        %511 = vset.pattern.permute.xlu0 4
        %512 = vperm.xlu0 %511, %v505
        %v513 = vpop.permute.xlu0 %512
        %v515 = vmul.f32 %v513, %v277
        %v516 = vadd.f32 %v499, %v515
        %517 = vrot.lane.b32.xlu0 %v424, 5
        %v518 = vpop.permute.xlu0 %517
        %v520 = vsub.f32 %v367, %v518
        %v521 = vmul.f32 %v520, 1.442695
        %v522 = vpow.pop %v521
        %524 = vrot.lane.b32.xlu0 %v522, 123
        %v525 = vpop.permute.xlu0 %524
        %v527 = vadd.f32 %v510, %v525
        %528 = vset.pattern.permute.xlu0 5
        %529 = vperm.xlu0 %528, %v522
        %v530 = vpop.permute.xlu0 %529
        %v532 = vmul.f32 %v530, %v277
        %534 = vrot.lane.b32.xlu0 %v532, 96
        %v535 = vpop.permute.xlu0 %534
        %v537 = vadd.f32 %v516, %v535
        %538 = vrot.lane.b32.xlu0 %v424, 6
        %v539 = vpop.permute.xlu0 %538
        %v541 = vsub.f32 %v378, %v539
        %v542 = vmul.f32 %v541, 1.442695
        %v543 = vpow.pop %v542
        %545 = vrot.lane.b32.xlu0 %v543, 122
        %v546 = vpop.permute.xlu0 %545
        %v548 = vadd.f32 %v527, %v546
        %549 = vset.pattern.permute.xlu0 6
        %550 = vperm.xlu0 %549, %v543
        %v551 = vpop.permute.xlu0 %550
        %v553 = vmul.f32 %v551, %v277
        %555 = vrot.lane.b32.xlu0 %v553, 64
        %v556 = vpop.permute.xlu0 %555
        %v558 = vadd.f32 %v537, %v556
        %559 = vrot.lane.b32.xlu0 %v424, 7
        %v560 = vpop.permute.xlu0 %559
        %v562 = vsub.f32 %v389, %v560
        %v563 = vmul.f32 %v562, 1.442695
        %v564 = vpow.pop %v563
        %566 = vrot.lane.b32.xlu0 %v564, 121
        %v567 = vpop.permute.xlu0 %566
        %v569 = vadd.f32 %v548, %v567
        %570 = vset.pattern.permute.xlu0 7
        %571 = vperm.xlu0 %570, %v564
        %v572 = vpop.permute.xlu0 %571
        %v574 = vmul.f32 %v572, %v277
        %576 = vrot.lane.b32.xlu0 %v574, 32
        %v577 = vpop.permute.xlu0 %576
        %v579 = vadd.f32 %v558, %v577
        %v580 = vrcp.pop %v569
        %v581 = vmul.f32 %v569, %v580
        %v582 = vsub.f32 2.0, %v581
        %v583 = vmul.f32 %v580, %v582
        %v584 = vmul.f32 %v569, %v583
        %v585 = vsub.f32 2.0, %v584
        %v586 = vmul.f32 %v583, %v585
        %588 = vset.pattern.permute.xlu0 0
        %589 = vperm.xlu0 %588, %v586
        %v590 = vpop.permute.xlu0 %589
        %v592 = vmul.f32 %v579, %v590
        %v593 = vadd.f32 %v592, %v275
        %594 = vst.msk [vmem:[%s266] sm:$0xff] %vm288, %v593
        %s595 = sand.u32 %s150, 1
        %s596 = scalar_lea.sflag [#allocation4], %s595
        %s597 = sand.u32 %s150, 1
        %s598 = smul.addr %s597, 8
        %s599 = scalar_lea.vmem [#allocation5], %s598
        // Predicated region
        $region45: #{tpu_custom_call.1} parent=39 // pred_check
          %p600 = pneg %p160
        $region46: #{tpu_custom_call.1} parent=39 // pred_check_branch
          %602 = sbr.rel (%p600) target = $region48
        $region47: #{tpu_custom_call.1} parent=39 // pred_region
          %s604 = ssub.s32 128, 128
          %605 = vsyncadd %s596, %s604
          %s606 = smul.addr %s22, 128
          %s607 = scalar_lea.hbm %s5, %s606
          %s609 = sshll.u32 %s599, 4
          %s610 = int_to_ptr.vmem [resolvable:$true] %s609
          %612 = dma.vmem_to_hbm [thread:$0]  %s610, 128, %s607, %s596
        $region48: #{tpu_custom_call.1} parent=39 // pred_fallthru
          _
      $region40: #{tpu_custom_call.1} parent=5 // pred_fallthru
        _
      %p613 = scmp.le.s32.totalorder 2, %s17
      // Predicated region
      $region49: #{tpu_custom_call.1} parent=5 // pred_check
        %p614 = pneg %p613
      $region50: #{tpu_custom_call.1} parent=5 // pred_check_branch
        %616 = sbr.rel (%p614) target = $region52
      $region51: #{tpu_custom_call.1} parent=5 // pred_region
        %s617 = ssub.s32 %s17, 2
        // Predicated region
        $region53: #{tpu_custom_call.1} parent=51 // pred_check
          %p618 = pneg %p166
        $region54: #{tpu_custom_call.1} parent=51 // pred_check_branch
          %620 = sbr.rel (%p618) target = $region56
        $region55: #{tpu_custom_call.1} parent=51 // pred_region
          %s621 = sand.u32 %s151, 1
          %s622 = scalar_lea.sflag [#allocation4], %s621
          %s623 = sand.u32 %s151, 1
          %s624 = smul.addr %s623, 8
          %s625 = scalar_lea.vmem [#allocation5], %s624
          %626 = dma.done %s622, 128
        $region56: #{tpu_custom_call.1} parent=51 // pred_fallthru
          _
      $region52: #{tpu_custom_call.1} parent=5 // pred_fallthru
        _
    $region6: #{tpu_custom_call.1} parent=1 // loop_footer
      %s21 = sadd.s32 1, %s17
    $region7: #{tpu_custom_call.1} parent=1 // loop_footer_branch
      %16 = sbr.rel target = $region3
    $region8: #{tpu_custom_call.1} parent=1 // loop_exit
      _
    %627 = vsyncpa [#allocation3], 1
    %s628 = scalar_lea.sflag [#allocation3], 1
    %629 = vsyncpa %s628, 1
    %630 = vsyncpa [#allocation4], 1
    %s631 = scalar_lea.sflag [#allocation4], 1
    %632 = vsyncpa %s631, 1

</llo_original>
